<compile_context>
chip_gen: v5e
topology: v5e:2x2
jax: 0.10.0
libtpu: 0.0.40
codegen_flags: <defaults>
</compile_context>

<pallas_src>
import functools

import jax
import jax.numpy as jnp
from jax.experimental import pallas as pl
from jax.experimental.pallas import tpu as pltpu

LANES = 128  # lane width of the packed output slab


# ----------------------------- Pallas kernel --------------------------------
def _backbone_kernel(h_out, emb_dim,
                     xp_ref, band_ref, bconv_ref, w1_ref, b1_ref, w2_ref, b2_ref,
                     out_ref):
    """One block of tile_n tiles: 3x3 conv -> ReLU -> avg-pool -> fc1 -> ReLU -> fc2."""
    tile_n = out_ref.shape[0]
    kh = band_ref.shape[0]          # conv kernel height (3)
    wp_cin = xp_ref.shape[2]        # (W+2)*Cin
    wcc = band_ref.shape[2]         # W*Cconv

    # Upcast the bf16 slab once; all slicing below is on the f32 *value*
    # (avoids packed-dtype sublane-offset slices of the ref).
    xpv = xp_ref[...].astype(jnp.float32)                     # (tile_n, H+2, (W+2)*Cin)

    # 3x3 conv as kh banded matmuls on the MXU (f32 accumulation).
    acc = None
    for dy in range(kh):                                      # static, 3 iterations
        xs = xpv[:, dy:dy + h_out, :].reshape(tile_n * h_out, wp_cin)
        part = jnp.dot(xs, band_ref[dy], preferred_element_type=jnp.float32)
        acc = part if acc is None else acc + part
    conv = jnp.maximum(acc + bconv_ref[...], 0.0)             # (tile_n*H, W*Cconv)

    # Global average pool: only the sum over H stays here (groups of H=16 rows,
    # 8-sublane aligned -> reshape is a view); sum over W and 1/(H*W) are folded
    # into the fc1 weight in the wrapper.
    s = jnp.sum(conv.reshape(tile_n, h_out, wcc), axis=1)     # (tile_n, W*Cconv)

    # fc1 (+ folded pooling) + ReLU -> 128-lane-padded embedding (lanes >= E are 0).
    emb = jnp.maximum(
        jnp.dot(s, w1_ref[...], preferred_element_type=jnp.float32) + b1_ref[...],
        0.0)                                                  # (tile_n, 128)

    # fc2: N=1 matvec on the VPU (mul + lane reduce); scalar bias from SMEM.
    logit = jnp.sum(emb * w2_ref[...], axis=-1, keepdims=True) + b2_ref[0]   # (tile_n, 1)

    # Lane-dense packed output via lane-index select (no unaligned lane concat):
    # lanes < E hold the embedding, lane E holds the logit, lanes > E are zero.
    lane = jax.lax.broadcasted_iota(jnp.int32, emb.shape, 1)
    out_ref[...] = jnp.where(lane == emb_dim, logit, emb)


# ------------------------------ weight prep ----------------------------------
def _build_band_weights(wt, width):
    """wt (Cout, Cin, KH, KW) -> (KH, (W+KW-1)*Cin, W*Cout) banded conv-as-matmul weights.

    band[dy, (w+dx)*Cin + cin, w*Cout + co] = wt[co, cin, dy, dx]
    so that   conv[., h, w, co] = sum_dy  xp_row(h+dy) @ band[dy]
    """
    cout, cin, kh, kw = wt.shape
    wp = width + kw - 1
    wt_t = jnp.transpose(wt, (2, 3, 1, 0))                    # (KH, KW, Cin, Cout)
    dx = jnp.arange(wp)[:, None] - jnp.arange(width)[None, :]  # (Wp, W)
    valid = (dx >= 0) & (dx < kw)
    dx_c = jnp.clip(dx, 0, kw - 1)
    blocks = jnp.where(valid[None, :, :, None, None],
                       wt_t[:, dx_c], 0.0)                     # (KH, Wp, W, Cin, Cout)
    return blocks.transpose(0, 1, 3, 2, 4).reshape(kh, wp * cin, width * cout)


def _round_up(x, m):
    return (x + m - 1) // m * m


def _pick_tile_n(n_tiles, per_tile_vmem_bytes, vmem_budget_bytes=24 << 20, max_tile_n=256):
    """Tiles per grid block: biggest count whose VMEM footprint fits the budget."""
    tile_n = max(1, vmem_budget_bytes // max(per_tile_vmem_bytes, 1))
    tile_n = min(tile_n, max_tile_n, n_tiles)
    if n_tiles > 1:
        tile_n = min(tile_n, -(-n_tiles // 2))   # keep >= 2 blocks (v7x has 2 TensorCores)
    if tile_n >= 8:
        tile_n -= tile_n % 8                     # unmasked 8-sublane output stores
    return max(tile_n, 1)


# ------------------------------- wrapper -------------------------------------
def raw_to_tile_model(x, tile_outputs_prev, params):
    """One backbone model: (x, prev_outputs) -> (tile_outputs, embeddings)."""
    del tile_outputs_prev  # first (and only) model ignores previous outputs
    B, T, Cin, H, W = x.shape
    N = B * T
    wt, bc, w1, b1, w2, b2 = params
    Cout, _, KH, KW = wt.shape
    E = w1.shape[1]
    assert E + 1 <= LANES, "packed output assumes emb_dim + 1 <= 128"

    Hp, Wp = H + KH - 1, W + KW - 1
    wp_cin = Wp * Cin
    wcc = W * Cout

    # Raw padded per-tile NHWC slab (bf16) -- the only data stream, ~0.6x raw f32 bytes.
    xt = x.reshape(N, Cin, H, W).transpose(0, 2, 3, 1)                     # (N, H, W, Cin)
    xp = jnp.pad(xt, ((0, 0), (KH // 2,) * 2, (KW // 2,) * 2, (0, 0)))
    xp = xp.reshape(N, Hp, wp_cin).astype(jnp.bfloat16)

    # Weights in matmul form (banded conv, pooled fc1 with 1/(H*W) folded, lane-padded heads).
    bands = _build_band_weights(wt, W)                                      # (KH, wp_cin, wcc) f32
    bias_row = jnp.tile(bc.reshape(1, Cout), (1, W))                        # (1, wcc)
    w1_big = jnp.pad(jnp.tile(w1, (W, 1)) / float(H * W), ((0, 0), (0, LANES - E)))
    b1_row = jnp.pad(b1.reshape(1, E), ((0, 0), (0, LANES - E)))
    w2_row = jnp.pad(w2.reshape(1, E), ((0, 0), (0, LANES - E)))

    # Block sizing from actual per-tile VMEM cost (bf16 slab x2 buffers + f32 upcast
    # + f32 conv intermediates + temps).  48 MiB scoped limit fits v7x's 64 MiB VMEM.
    slab_bf16 = _round_up(Hp, 16) * _round_up(wp_cin, LANES) * 2
    slab_f32 = _round_up(Hp, 8) * _round_up(wp_cin, LANES) * 4
    conv_f32 = H * _round_up(wcc, LANES) * 4
    per_tile_vmem = 2 * slab_bf16 + slab_f32 + 3 * conv_f32 + 4096
    tile_n = _pick_tile_n(N, per_tile_vmem)
    num_blocks = pl.cdiv(N, tile_n)
    n_pad = num_blocks * tile_n
    if n_pad != N:                               # pad tile count instead of shrinking blocks
        xp = jnp.pad(xp, ((0, n_pad - N), (0, 0), (0, 0)))

    flops = 2 * n_pad * H * wp_cin * wcc * KH + 2 * n_pad * wcc * LANES + 4 * n_pad * LANES
    bytes_accessed = (int(xp.size) * 2 + int(bands.size) * 4 + int(w1_big.size) * 4
                      + (int(bias_row.size) + int(b1_row.size) + int(w2_row.size)
                         + int(b2.size)) * 4
                      + n_pad * LANES * 4)

    packed = pl.pallas_call(
        functools.partial(_backbone_kernel, H, E),
        grid=(num_blocks,),
        in_specs=[
            pl.BlockSpec((tile_n, Hp, wp_cin), lambda i: (i, 0, 0)),   # padded raw slab (streamed)
            pl.BlockSpec((KH, wp_cin, wcc), lambda i: (0, 0, 0)),      # banded conv weights
            pl.BlockSpec((1, wcc), lambda i: (0, 0)),                  # conv bias row
            pl.BlockSpec((wcc, LANES), lambda i: (0, 0)),              # fc1 weight (pool folded)
            pl.BlockSpec((1, LANES), lambda i: (0, 0)),                # fc1 bias row
            pl.BlockSpec((1, LANES), lambda i: (0, 0)),                # fc2 weight row
            pl.BlockSpec(memory_space=pltpu.MemorySpace.SMEM),         # fc2 bias scalar
        ],
        out_specs=pl.BlockSpec((None, tile_n, LANES), lambda i: (i, 0, 0)),
        out_shape=jax.ShapeDtypeStruct((num_blocks, tile_n, LANES), jnp.float32),
        compiler_params=pltpu.CompilerParams(
            dimension_semantics=("parallel",),
            vmem_limit_bytes=48 * 1024 * 1024,
        ),
        cost_estimate=pl.CostEstimate(flops=int(flops), transcendentals=0,
                                      bytes_accessed=int(bytes_accessed)),
    )(xp, bands, bias_row, w1_big, b1_row, w2_row, b2)

    packed = packed.reshape(n_pad, LANES)[:N]
    embeddings = packed[:, :E].reshape(B, T, E)            # (batch, num_tiles, E)
    tile_outputs = packed[:, E:E + 1].reshape(B, T, 1)     # (batch, num_tiles, 1)
    return tile_outputs, embeddings


def main_model_forward(x, model_params_list):
    """MainModel.forward: outputs=None; for model: outputs, x = model(x, outputs)."""
    outputs = None
    for params in model_params_list:
        outputs, x = raw_to_tile_model(x, outputs, params)
    return outputs


# ------------------------- deterministic parameters --------------------------
def init_params(key, cin=3, cconv=16, emb=32):
    ks = jax.random.split(key, 6)
    s = 0.1
    wt = s * jax.random.normal(ks[0], (cconv, cin, 3, 3), jnp.float32)   # PyTorch OIHW layout
    bc = s * jax.random.normal(ks[1], (cconv,), jnp.float32)
    w1 = s * jax.random.normal(ks[2], (cconv, emb), jnp.float32)
    b1 = s * jax.random.normal(ks[3], (emb,), jnp.float32)
    w2 = s * jax.random.normal(ks[4], (emb,), jnp.float32)
    b2 = s * jax.random.normal(ks[5], (1,), jnp.float32)
    return (wt, bc, w1, b1, w2, b2)


# ------------------------------ pure-JAX ref ---------------------------------
def _reference_forward(x, params):
    wt, bc, w1, b1, w2, b2 = params
    B, T, Cin, H, W = x.shape
    N = B * T
    xb = x.astype(jnp.bfloat16).astype(jnp.float32).reshape(N, Cin, H, W)   # same bf16 stream
    conv = jax.lax.conv_general_dilated(
        xb, wt, window_strides=(1, 1), padding=((1, 1), (1, 1)),
        dimension_numbers=("NCHW", "OIHW", "NCHW"),
        precision=jax.lax.Precision.HIGHEST)
    conv = jnp.maximum(conv + bc.reshape(1, -1, 1, 1), 0.0)
    pooled = conv.mean(axis=(2, 3))                                         # (N, Cconv)
    emb = jnp.maximum(pooled @ w1 + b1, 0.0)                                # (N, E)
    logits = jnp.sum(emb * w2, axis=-1, keepdims=True) + b2                 # (N, 1)
    return logits.reshape(B, T, 1), emb.reshape(B, T, -1)


# --------------------------------- main ---------------------------------------
if __name__ == "__main__":
    key = jax.random.PRNGKey(0)
    kx, kp = jax.random.split(key)

    B, T, Cin, H, W = 2, 4, 3, 16, 16          # batch=2, num_tiles=4, NCHW tiles
    x = jax.random.normal(kx, (B, T, Cin, H, W), jnp.float32)
    params = init_params(kp, cin=Cin, cconv=16, emb=32)

    out = main_model_forward(x, [params])
    out = jax.block_until_ready(out)

    ref_logits, ref_emb = _reference_forward(x, params)
    assert out.shape == (B, T, 1), out.shape
    assert jnp.allclose(out, ref_logits, atol=1e-2, rtol=1e-2), "logits mismatch vs reference"

    # also validate the embeddings output of the backbone (second return value)
    tile_out, emb = raw_to_tile_model(x, None, params)
    tile_out, emb = jax.block_until_ready((tile_out, emb))
    assert emb.shape == (B, T, 32), emb.shape
    assert jnp.allclose(tile_out, ref_logits, atol=1e-2, rtol=1e-2), "logits mismatch"
    assert jnp.allclose(emb, ref_emb, atol=1e-2, rtol=1e-2), "embeddings mismatch"

    print("KERNEL_OK")
</pallas_src>

<mosaic_0001>
module attributes {stable_mosaic.version = 11 : i64} {
  func.func @_backbone_kernel(%arg0: i32, %arg1: memref<4x18x54xbf16, #tpu.memory_space<vmem>>, %arg2: memref<3x54x256xf32, #tpu.memory_space<vmem>>, %arg3: memref<1x256xf32, #tpu.memory_space<vmem>>, %arg4: memref<256x128xf32, #tpu.memory_space<vmem>>, %arg5: memref<1x128xf32, #tpu.memory_space<vmem>>, %arg6: memref<1x128xf32, #tpu.memory_space<vmem>>, %arg7: memref<1xf32, #tpu.memory_space<smem>>, %arg8: memref<1x4x128xf32, #tpu.memory_space<vmem>>) attributes {dimension_semantics = [#tpu.dimension_semantics<parallel>], iteration_bounds = array<i64: 2>, scalar_prefetch = 0 : i64, scratch_operands = 0 : i64, tpu.core_type = #tpu.core_type<tc>, window_params = [{transform_indices = @transform_0, window_bounds = array<i64: 4, 18, 54>}, {pipeline_mode = #tpu.pipeline_mode<synchronous>, transform_indices = @transform_1, window_bounds = array<i64: 3, 54, 256>}, {pipeline_mode = #tpu.pipeline_mode<synchronous>, transform_indices = @transform_2, window_bounds = array<i64: 1, 256>}, {pipeline_mode = #tpu.pipeline_mode<synchronous>, transform_indices = @transform_3, window_bounds = array<i64: 256, 128>}, {pipeline_mode = #tpu.pipeline_mode<synchronous>, transform_indices = @transform_4, window_bounds = array<i64: 1, 128>}, {pipeline_mode = #tpu.pipeline_mode<synchronous>, transform_indices = @transform_5, window_bounds = array<i64: 1, 128>}, {transform_indices = @transform_6, window_bounds = array<i64: 1>}, {transform_indices = @transform_7, window_bounds = array<i64: 1, 4, 128>}]} {
    %c0 = arith.constant 0 : index
    %c0_0 = arith.constant 0 : index
    %c0_1 = arith.constant 0 : index
    %0 = vector.load %arg1[%c0, %c0_0, %c0_1] : memref<4x18x54xbf16, #tpu.memory_space<vmem>>, vector<4x18x54xbf16>
    %1 = arith.extf %0 : vector<4x18x54xbf16> to vector<4x18x54xf32>
    %2 = vector.extract_strided_slice %1 {offsets = [0, 0, 0], sizes = [4, 16, 54], strides = [1, 1, 1]} : vector<4x18x54xf32> to vector<4x16x54xf32>
    %3 = vector.shape_cast %2 : vector<4x16x54xf32> to vector<64x54xf32>
    %c0_2 = arith.constant 0 : index
    %c0_3 = arith.constant 0 : index
    %c0_4 = arith.constant 0 : index
    %4 = vector.load %arg2[%c0_2, %c0_3, %c0_4] : memref<3x54x256xf32, #tpu.memory_space<vmem>>, vector<1x54x256xf32>
    %5 = vector.shape_cast %4 : vector<1x54x256xf32> to vector<54x256xf32>
    %cst = arith.constant dense<0.000000e+00> : vector<64x256xf32>
    %6 = tpu.matmul %3, %5, %cst {dimension_numbers = #tpu.dot_dimension_numbers<[1], [0], [0], [1], [0, 0, 1, 1], [], []>} : vector<64x54xf32>, vector<54x256xf32>, vector<64x256xf32> -> vector<64x256xf32>
    %7 = vector.extract_strided_slice %1 {offsets = [0, 1, 0], sizes = [4, 16, 54], strides = [1, 1, 1]} : vector<4x18x54xf32> to vector<4x16x54xf32>
    %8 = vector.shape_cast %7 : vector<4x16x54xf32> to vector<64x54xf32>
    %c1 = arith.constant 1 : index
    %c0_5 = arith.constant 0 : index
    %c0_6 = arith.constant 0 : index
    %9 = vector.load %arg2[%c1, %c0_5, %c0_6] : memref<3x54x256xf32, #tpu.memory_space<vmem>>, vector<1x54x256xf32>
    %10 = vector.shape_cast %9 : vector<1x54x256xf32> to vector<54x256xf32>
    %cst_7 = arith.constant dense<0.000000e+00> : vector<64x256xf32>
    %11 = tpu.matmul %8, %10, %cst_7 {dimension_numbers = #tpu.dot_dimension_numbers<[1], [0], [0], [1], [0, 0, 1, 1], [], []>} : vector<64x54xf32>, vector<54x256xf32>, vector<64x256xf32> -> vector<64x256xf32>
    %12 = arith.addf %6, %11 : vector<64x256xf32>
    %13 = vector.extract_strided_slice %1 {offsets = [0, 2, 0], sizes = [4, 16, 54], strides = [1, 1, 1]} : vector<4x18x54xf32> to vector<4x16x54xf32>
    %14 = vector.shape_cast %13 : vector<4x16x54xf32> to vector<64x54xf32>
    %c2 = arith.constant 2 : index
    %c0_8 = arith.constant 0 : index
    %c0_9 = arith.constant 0 : index
    %15 = vector.load %arg2[%c2, %c0_8, %c0_9] : memref<3x54x256xf32, #tpu.memory_space<vmem>>, vector<1x54x256xf32>
    %16 = vector.shape_cast %15 : vector<1x54x256xf32> to vector<54x256xf32>
    %cst_10 = arith.constant dense<0.000000e+00> : vector<64x256xf32>
    %17 = tpu.matmul %14, %16, %cst_10 {dimension_numbers = #tpu.dot_dimension_numbers<[1], [0], [0], [1], [0, 0, 1, 1], [], []>} : vector<64x54xf32>, vector<54x256xf32>, vector<64x256xf32> -> vector<64x256xf32>
    %18 = arith.addf %12, %17 : vector<64x256xf32>
    %c0_11 = arith.constant 0 : index
    %c0_12 = arith.constant 0 : index
    %19 = vector.load %arg3[%c0_11, %c0_12] : memref<1x256xf32, #tpu.memory_space<vmem>>, vector<1x256xf32>
    %20 = vector.broadcast %19 : vector<1x256xf32> to vector<64x256xf32>
    %21 = arith.addf %18, %20 : vector<64x256xf32>
    %cst_13 = arith.constant 0.000000e+00 : f32
    %22 = vector.broadcast %cst_13 : f32 to vector<64x256xf32>
    %23 = arith.maximumf %21, %22 : vector<64x256xf32>
    %24 = vector.shape_cast %23 : vector<64x256xf32> to vector<4x16x256xf32>
    %cst_14 = arith.constant dense<0.000000e+00> : vector<4x256xf32>
    %25 = vector.multi_reduction <add>, %24, %cst_14 [1] : vector<4x16x256xf32> to vector<4x256xf32>
    %c0_15 = arith.constant 0 : index
    %c0_16 = arith.constant 0 : index
    %26 = vector.load %arg4[%c0_15, %c0_16] : memref<256x128xf32, #tpu.memory_space<vmem>>, vector<256x128xf32>
    %cst_17 = arith.constant dense<0.000000e+00> : vector<4x128xf32>
    %27 = tpu.matmul %25, %26, %cst_17 {dimension_numbers = #tpu.dot_dimension_numbers<[1], [0], [0], [1], [0, 0, 1, 1], [], []>} : vector<4x256xf32>, vector<256x128xf32>, vector<4x128xf32> -> vector<4x128xf32>
    %c0_18 = arith.constant 0 : index
    %c0_19 = arith.constant 0 : index
    %28 = vector.load %arg5[%c0_18, %c0_19] : memref<1x128xf32, #tpu.memory_space<vmem>>, vector<1x128xf32>
    %29 = vector.broadcast %28 : vector<1x128xf32> to vector<4x128xf32>
    %30 = arith.addf %27, %29 : vector<4x128xf32>
    %cst_20 = arith.constant 0.000000e+00 : f32
    %31 = vector.broadcast %cst_20 : f32 to vector<4x128xf32>
    %32 = arith.maximumf %30, %31 : vector<4x128xf32>
    %c0_21 = arith.constant 0 : index
    %c0_22 = arith.constant 0 : index
    %33 = vector.load %arg6[%c0_21, %c0_22] : memref<1x128xf32, #tpu.memory_space<vmem>>, vector<1x128xf32>
    %34 = vector.broadcast %33 : vector<1x128xf32> to vector<4x128xf32>
    %35 = arith.mulf %32, %34 : vector<4x128xf32>
    %cst_23 = arith.constant dense<0.000000e+00> : vector<4xf32>
    %36 = vector.multi_reduction <add>, %35, %cst_23 [1] : vector<4x128xf32> to vector<4xf32>
    %37 = vector.shape_cast %36 : vector<4xf32> to vector<4x1xf32>
    %c0_24 = arith.constant 0 : index
    %38 = memref.load %arg7[%c0_24] : memref<1xf32, #tpu.memory_space<smem>>
    %39 = vector.broadcast %38 : f32 to vector<4x1xf32>
    %40 = arith.addf %37, %39 : vector<4x1xf32>
    %41 = tpu.iota {dimensions = array<i32: 1>} : vector<4x128xi32>
    %c32_i32 = arith.constant 32 : i32
    %42 = vector.broadcast %c32_i32 : i32 to vector<4x128xi32>
    %43 = arith.cmpi eq, %41, %42 : vector<4x128xi32>
    %44 = vector.shape_cast %40 : vector<4x1xf32> to vector<4x1xf32>
    %45 = vector.broadcast %44 : vector<4x1xf32> to vector<4x128xf32>
    %46 = arith.select %43, %45, %32 : vector<4x128xi1>, vector<4x128xf32>
    %c0_25 = arith.constant 0 : index
    %c0_26 = arith.constant 0 : index
    %c0_27 = arith.constant 0 : index
    %47 = vector.load %arg8[%c0_25, %c0_26, %c0_27] : memref<1x4x128xf32, #tpu.memory_space<vmem>>, vector<1x4x128xf32>
    %48 = vector.shape_cast %47 : vector<1x4x128xf32> to vector<4x128xf32>
    %49 = vector.shape_cast %46 : vector<4x128xf32> to vector<1x4x128xf32>
    tpu.vector_store %arg8[%c0_25, %c0_26, %c0_27], %49 {strides = array<i32>} : memref<1x4x128xf32, #tpu.memory_space<vmem>>, vector<1x4x128xf32>,
    return
  }
  func.func @transform_0(%arg0: i32) -> (i32, i32, i32) {
    %c0_i32 = arith.constant 0 : i32
    %c0_i32_0 = arith.constant 0 : i32
    %c0_i32_1 = arith.constant 0 : i32
    return %arg0, %c0_i32, %c0_i32_0 : i32, i32, i32
  }
  func.func @transform_1(%arg0: i32) -> (i32, i32, i32) {
    %c0_i32 = arith.constant 0 : i32
    %c0_i32_0 = arith.constant 0 : i32
    %c0_i32_1 = arith.constant 0 : i32
    %c0_i32_2 = arith.constant 0 : i32
    return %c0_i32, %c0_i32_0, %c0_i32_1 : i32, i32, i32
  }
  func.func @transform_2(%arg0: i32) -> (i32, i32) {
    %c0_i32 = arith.constant 0 : i32
    %c0_i32_0 = arith.constant 0 : i32
    %c0_i32_1 = arith.constant 0 : i32
    return %c0_i32, %c0_i32_0 : i32, i32
  }
  func.func @transform_3(%arg0: i32) -> (i32, i32) {
    %c0_i32 = arith.constant 0 : i32
    %c0_i32_0 = arith.constant 0 : i32
    %c0_i32_1 = arith.constant 0 : i32
    return %c0_i32, %c0_i32_0 : i32, i32
  }
  func.func @transform_4(%arg0: i32) -> (i32, i32) {
    %c0_i32 = arith.constant 0 : i32
    %c0_i32_0 = arith.constant 0 : i32
    %c0_i32_1 = arith.constant 0 : i32
    return %c0_i32, %c0_i32_0 : i32, i32
  }
  func.func @transform_5(%arg0: i32) -> (i32, i32) {
    %c0_i32 = arith.constant 0 : i32
    %c0_i32_0 = arith.constant 0 : i32
    %c0_i32_1 = arith.constant 0 : i32
    return %c0_i32, %c0_i32_0 : i32, i32
  }
  func.func @transform_6(%arg0: i32) -> i32 {
    %c0_i32 = arith.constant 0 : i32
    %c0_i32_0 = arith.constant 0 : i32
    return %c0_i32 : i32
  }
  func.func @transform_7(%arg0: i32) -> (i32, i32, i32) {
    %c0_i32 = arith.constant 0 : i32
    %c0_i32_0 = arith.constant 0 : i32
    %c0_i32_1 = arith.constant 0 : i32
    return %arg0, %c0_i32, %c0_i32_0 : i32, i32, i32
  }
}

</mosaic_0001>

<llo_original>
// kernel: tpu_custom_call.1
$region0: #{tpu_custom_call.1}
  #allocation0 [shape = 'u32[]', space=smem, size = 0x4, offset = 0x4, fixed_abs, tag = 'smem constant byte address 0x4 - core index']
  #allocation1 [shape = 'u32[72,128]{1,0:T(1,128)}', space=vmem, size = 0x9000, scoped, tag = 'internal scratch']
  #allocation2 [shape = 'f32[1]{0:T(128)S(6)}', space=smem, size = 0x200, scoped, tag = 'scoped memory for tpu_custom_call.1']
  %s0 = inlined_call_operand.vmem [shape: bf16[8,18,54], index: 0, kind: input, shape index: {}]
  %s1 = inlined_call_operand.hbm [shape: f32[3,54,256], index: 1, kind: input, shape index: {}]
  %s2 = inlined_call_operand.vmem [shape: f32[1,256], index: 2, kind: input, shape index: {}]
  %s3 = inlined_call_operand.hbm [shape: f32[256,128], index: 3, kind: input, shape index: {}]
  %s4 = inlined_call_operand.vmem [shape: f32[1,128], index: 4, kind: input, shape index: {}]
  %s5 = inlined_call_operand.vmem [shape: f32[1,128], index: 5, kind: input, shape index: {}]
  %s6 = inlined_call_operand.<no memory space> [shape: f32[1], index: 6, kind: input, shape index: {}]
  %s7 = inlined_call_operand.hbm [shape: f32[2,4,128], index: 7, kind: output, shape index: {}]
  %s8 = sld [smem:[#allocation0]]
  $region69: #{tpu_custom_call.1} parent=0
    _
  %s10 = ssub.s32 1, %s8
  %s11 = scalar_select 0, %s10, %s8
  %12 = sst [smem:[#allocation2]] %s6
  $region1: #{tpu_custom_call.1} parent=0
    #allocation3 [shape = 'u8[172032]{0}', space=vmem, size = 0x2a000, scoped, tag = 'input window, operand 1, single buffered']
    #allocation4 [shape = 's32[2]{0}', space=sflag, size = 0x8, scoped, tag = 'scoped memory for tpu_custom_call.1']
    #allocation5 [shape = 's32[2]{0}', space=sflag, size = 0x8, scoped, tag = 'scoped memory for tpu_custom_call.1']
    #allocation6 [shape = 'u8[131072]{0}', space=vmem, size = 0x20000, scoped, tag = 'input window, operand 3, single buffered']
    #allocation7 [shape = 's32[1]{0}', space=sflag, size = 0x4, scoped, tag = 'scoped memory for tpu_custom_call.1']
    #allocation8 [shape = 'u8[4096]{0}', space=vmem, size = 0x1000, scoped, tag = 'output window, operand 0']
    %13 = vsyncpa [#allocation4], 0
    %14 = vsyncpa [#allocation7], 0
    %15 = vsyncpa [#allocation5], 0
    %s16 = scalar_lea.sflag [#allocation5], 1
    %17 = vsyncpa %s16, 0
    loop: start=0, step=1, limit=4
    $region2: #{tpu_custom_call.1} parent=1 // loop_pre_header
      _
    $region3: #{tpu_custom_call.1} parent=1 // loop_header
      %s19 = sphi 0, %s23
      %p20 = scmp.ge.s32.totalorder %s19, 4
      %s29 = sphi 0, %s31
      %s32 = sphi 0, %s29
      %s33 = sphi 0, %s32
      %s49 = sphi 0, %s33
      %s53 = sphi 0, %s53
      %s55 = sphi 0, %s53
      %s56 = sphi 0, %s55
      %s70 = sphi 0, %s56
      %s74 = sphi 0, %s74
      %s76 = sphi 0, %s74
      %s77 = sphi 0, %s76
      %s91 = sphi 0, %s77
      %s95 = sphi 0, %s95
      %s97 = sphi 0, %s95
      %s98 = sphi 0, %s97
      %s112 = sphi 0, %s98
      %s116 = sphi 0, %s116
      %s118 = sphi 0, %s116
      %s119 = sphi 0, %s118
      %s133 = sphi 0, %s119
      %s137 = sphi 0, %s137
      %s139 = sphi 0, %s137
      %s140 = sphi 0, %s139
      %s154 = sphi 0, %s140
      %s158 = sphi 0, %s158
      %s160 = sphi 0, %s158
      %s161 = sphi 0, %s160
      %s175 = sphi 0, %s161
      %s181 = sphi 0, %s183
      %s184 = sphi 0, %s181
      %s185 = sphi 0, %s184
      %s201 = sphi 0, %s185
    $region4: #{tpu_custom_call.1} parent=1 // loop_header_branch
      %22 = sbr.rel (%p20) target = $region8
    $region5: #{tpu_custom_call.1} parent=1 // loop_body
      %s24 = ssub.s32 %s19, 1
      %s25 = ssub.s32 %s19, 2
      %s26 = sadd.s32 %s19, 1
      %s27 = ssub.s32 %s19, %s26
      %p28 = scmp.eq.s32.totalorder %s27, 0
      %s30 = sadd.s32 %s29, 1
      %s31 = scalar_select %p28, %s29, %s30
      %p34 = pneg %p28
      %p35 = scmp.eq.s32.totalorder %s19, 1
      %p36 = por %p34, %p35
      %p37 = scmp.ne.s32.totalorder %s29, %s32
      %p38 = scmp.eq.s32.totalorder %s19, 0
      %p39 = por %p37, %p38
      %p40 = scmp.ne.s32.totalorder %s29, %s32
      %p41 = scmp.eq.s32.totalorder %s24, 1
      %p42 = por %p40, %p41
      %p43 = scmp.ne.s32.totalorder %s32, %s33
      %p44 = scmp.eq.s32.totalorder %s24, 0
      %p45 = por %p43, %p44
      %p46 = scmp.ne.s32.totalorder %s32, %s33
      %p47 = scmp.eq.s32.totalorder %s25, 1
      %p48 = por %p46, %p47
      %p50 = scmp.ne.s32.totalorder %s33, %s49
      %p51 = scmp.eq.s32.totalorder %s25, 0
      %p52 = por %p50, %p51
      %s54 = sadd.s32 %s53, 1
      %p57 = scmp.eq.s32.totalorder %s19, 1
      %p58 = scmp.ne.s32.totalorder %s53, %s55
      %p59 = scmp.eq.s32.totalorder %s19, 0
      %p60 = por %p58, %p59
      %p61 = scmp.ne.s32.totalorder %s53, %s55
      %p62 = scmp.eq.s32.totalorder %s24, 1
      %p63 = por %p61, %p62
      %p64 = scmp.ne.s32.totalorder %s55, %s56
      %p65 = scmp.eq.s32.totalorder %s24, 0
      %p66 = por %p64, %p65
      %p67 = scmp.ne.s32.totalorder %s55, %s56
      %p68 = scmp.eq.s32.totalorder %s25, 1
      %p69 = por %p67, %p68
      %p71 = scmp.ne.s32.totalorder %s56, %s70
      %p72 = scmp.eq.s32.totalorder %s25, 0
      %p73 = por %p71, %p72
      %s75 = sadd.s32 %s74, 1
      %p78 = scmp.eq.s32.totalorder %s19, 1
      %p79 = scmp.ne.s32.totalorder %s74, %s76
      %p80 = scmp.eq.s32.totalorder %s19, 0
      %p81 = por %p79, %p80
      %p82 = scmp.ne.s32.totalorder %s74, %s76
      %p83 = scmp.eq.s32.totalorder %s24, 1
      %p84 = por %p82, %p83
      %p85 = scmp.ne.s32.totalorder %s76, %s77
      %p86 = scmp.eq.s32.totalorder %s24, 0
      %p87 = por %p85, %p86
      %p88 = scmp.ne.s32.totalorder %s76, %s77
      %p89 = scmp.eq.s32.totalorder %s25, 1
      %p90 = por %p88, %p89
      %p92 = scmp.ne.s32.totalorder %s77, %s91
      %p93 = scmp.eq.s32.totalorder %s25, 0
      %p94 = por %p92, %p93
      %s96 = sadd.s32 %s95, 1
      %p99 = scmp.eq.s32.totalorder %s19, 1
      %p100 = scmp.ne.s32.totalorder %s95, %s97
      %p101 = scmp.eq.s32.totalorder %s19, 0
      %p102 = por %p100, %p101
      %p103 = scmp.ne.s32.totalorder %s95, %s97
      %p104 = scmp.eq.s32.totalorder %s24, 1
      %p105 = por %p103, %p104
      %p106 = scmp.ne.s32.totalorder %s97, %s98
      %p107 = scmp.eq.s32.totalorder %s24, 0
      %p108 = por %p106, %p107
      %p109 = scmp.ne.s32.totalorder %s97, %s98
      %p110 = scmp.eq.s32.totalorder %s25, 1
      %p111 = por %p109, %p110
      %p113 = scmp.ne.s32.totalorder %s98, %s112
      %p114 = scmp.eq.s32.totalorder %s25, 0
      %p115 = por %p113, %p114
      %s117 = sadd.s32 %s116, 1
      %p120 = scmp.eq.s32.totalorder %s19, 1
      %p121 = scmp.ne.s32.totalorder %s116, %s118
      %p122 = scmp.eq.s32.totalorder %s19, 0
      %p123 = por %p121, %p122
      %p124 = scmp.ne.s32.totalorder %s116, %s118
      %p125 = scmp.eq.s32.totalorder %s24, 1
      %p126 = por %p124, %p125
      %p127 = scmp.ne.s32.totalorder %s118, %s119
      %p128 = scmp.eq.s32.totalorder %s24, 0
      %p129 = por %p127, %p128
      %p130 = scmp.ne.s32.totalorder %s118, %s119
      %p131 = scmp.eq.s32.totalorder %s25, 1
      %p132 = por %p130, %p131
      %p134 = scmp.ne.s32.totalorder %s119, %s133
      %p135 = scmp.eq.s32.totalorder %s25, 0
      %p136 = por %p134, %p135
      %s138 = sadd.s32 %s137, 1
      %p141 = scmp.eq.s32.totalorder %s19, 1
      %p142 = scmp.ne.s32.totalorder %s137, %s139
      %p143 = scmp.eq.s32.totalorder %s19, 0
      %p144 = por %p142, %p143
      %p145 = scmp.ne.s32.totalorder %s137, %s139
      %p146 = scmp.eq.s32.totalorder %s24, 1
      %p147 = por %p145, %p146
      %p148 = scmp.ne.s32.totalorder %s139, %s140
      %p149 = scmp.eq.s32.totalorder %s24, 0
      %p150 = por %p148, %p149
      %p151 = scmp.ne.s32.totalorder %s139, %s140
      %p152 = scmp.eq.s32.totalorder %s25, 1
      %p153 = por %p151, %p152
      %p155 = scmp.ne.s32.totalorder %s140, %s154
      %p156 = scmp.eq.s32.totalorder %s25, 0
      %p157 = por %p155, %p156
      %s159 = sadd.s32 %s158, 1
      %p162 = scmp.eq.s32.totalorder %s19, 1
      %p163 = scmp.ne.s32.totalorder %s158, %s160
      %p164 = scmp.eq.s32.totalorder %s19, 0
      %p165 = por %p163, %p164
      %p166 = scmp.ne.s32.totalorder %s158, %s160
      %p167 = scmp.eq.s32.totalorder %s24, 1
      %p168 = por %p166, %p167
      %p169 = scmp.ne.s32.totalorder %s160, %s161
      %p170 = scmp.eq.s32.totalorder %s24, 0
      %p171 = por %p169, %p170
      %p172 = scmp.ne.s32.totalorder %s160, %s161
      %p173 = scmp.eq.s32.totalorder %s25, 1
      %p174 = por %p172, %p173
      %p176 = scmp.ne.s32.totalorder %s161, %s175
      %p177 = scmp.eq.s32.totalorder %s25, 0
      %p178 = por %p176, %p177
      %s179 = ssub.s32 %s19, %s26
      %p180 = scmp.eq.s32.totalorder %s179, 0
      %s182 = sadd.s32 %s181, 1
      %s183 = scalar_select %p180, %s181, %s182
      %p186 = pneg %p180
      %p187 = scmp.eq.s32.totalorder %s19, 1
      %p188 = por %p186, %p187
      %p189 = scmp.ne.s32.totalorder %s181, %s184
      %p190 = scmp.eq.s32.totalorder %s19, 0
      %p191 = por %p189, %p190
      %p192 = scmp.ne.s32.totalorder %s181, %s184
      %p193 = scmp.eq.s32.totalorder %s24, 1
      %p194 = por %p192, %p193
      %p195 = scmp.ne.s32.totalorder %s184, %s185
      %p196 = scmp.eq.s32.totalorder %s24, 0
      %p197 = por %p195, %p196
      %p198 = scmp.ne.s32.totalorder %s184, %s185
      %p199 = scmp.eq.s32.totalorder %s25, 1
      %p200 = por %p198, %p199
      %p202 = scmp.ne.s32.totalorder %s185, %s201
      %p203 = scmp.eq.s32.totalorder %s25, 0
      %p204 = por %p202, %p203
      %p205 = scmp.le.s32.totalorder 1, %s19
      %p206 = scmp.lt.s32.totalorder %s19, 3
      %p207 = pnand %p205, %p206
      %p208 = pneg %p207
      // Predicated region
      $region9: #{tpu_custom_call.1} parent=5 // pred_check
        _
      $region10: #{tpu_custom_call.1} parent=5 // pred_check_branch
        %210 = sbr.rel (%p207) target = $region12
      $region11: #{tpu_custom_call.1} parent=5 // pred_region
        %s211 = ssub.s32 %s19, 1
        // Predicated region
        $region13: #{tpu_custom_call.1} parent=11 // pred_check
          %p212 = pneg %p66
        $region14: #{tpu_custom_call.1} parent=11 // pred_check_branch
          %214 = sbr.rel (%p212) target = $region16
        $region15: #{tpu_custom_call.1} parent=11 // pred_region
          %216 = vsyncadd [#allocation4], 0
          %s217 = sshll.u32 %s1, 4
          %s218 = int_to_ptr.hbm [resolvable:$true] %s217
          %s219 = sshll.u32 [#allocation3], 4
          %s220 = int_to_ptr.vmem [resolvable:$true] %s219
          %225 = dma.hbm_to_vmem [thread:$0]  %s218, 5376, %s220, [#allocation4], 256, 256, 16
        $region16: #{tpu_custom_call.1} parent=11 // pred_fallthru
          _
        // Predicated region
        $region17: #{tpu_custom_call.1} parent=11 // pred_check
          %p226 = pneg %p87
        $region18: #{tpu_custom_call.1} parent=11 // pred_check_branch
          %228 = sbr.rel (%p226) target = $region20
        $region19: #{tpu_custom_call.1} parent=11 // pred_region
          _
        $region20: #{tpu_custom_call.1} parent=11 // pred_fallthru
          _
        // Predicated region
        $region21: #{tpu_custom_call.1} parent=11 // pred_check
          %p229 = pneg %p108
        $region22: #{tpu_custom_call.1} parent=11 // pred_check_branch
          %231 = sbr.rel (%p229) target = $region24
        $region23: #{tpu_custom_call.1} parent=11 // pred_region
          %233 = vsyncadd [#allocation7], 0
          %s234 = sshll.u32 %s3, 4
          %s235 = int_to_ptr.hbm [resolvable:$true] %s234
          %s236 = sshll.u32 [#allocation6], 4
          %s237 = int_to_ptr.vmem [resolvable:$true] %s236
          %242 = dma.hbm_to_vmem [thread:$0]  %s235, 4096, %s237, [#allocation7], 128, 128, 8
        $region24: #{tpu_custom_call.1} parent=11 // pred_fallthru
          _
        // Predicated region
        $region25: #{tpu_custom_call.1} parent=11 // pred_check
          %p243 = pneg %p129
        $region26: #{tpu_custom_call.1} parent=11 // pred_check_branch
          %245 = sbr.rel (%p243) target = $region28
        $region27: #{tpu_custom_call.1} parent=11 // pred_region
          _
        $region28: #{tpu_custom_call.1} parent=11 // pred_fallthru
          _
        // Predicated region
        $region29: #{tpu_custom_call.1} parent=11 // pred_check
          %p246 = pneg %p150
        $region30: #{tpu_custom_call.1} parent=11 // pred_check_branch
          %248 = sbr.rel (%p246) target = $region32
        $region31: #{tpu_custom_call.1} parent=11 // pred_region
          _
        $region32: #{tpu_custom_call.1} parent=11 // pred_fallthru
          _
        // Predicated region
        $region33: #{tpu_custom_call.1} parent=11 // pred_check
          %p249 = pneg %p171
        $region34: #{tpu_custom_call.1} parent=11 // pred_check_branch
          %251 = sbr.rel (%p249) target = $region36
        $region35: #{tpu_custom_call.1} parent=11 // pred_region
          _
        $region36: #{tpu_custom_call.1} parent=11 // pred_fallthru
          _
      $region12: #{tpu_custom_call.1} parent=5 // pred_fallthru
        _
      %p252 = scmp.lt.s32.totalorder %s19, 2
      // Predicated region
      $region37: #{tpu_custom_call.1} parent=5 // pred_check
        %p253 = pneg %p252
      $region38: #{tpu_custom_call.1} parent=5 // pred_check_branch
        %255 = sbr.rel (%p253) target = $region40
      $region39: #{tpu_custom_call.1} parent=5 // pred_region
        // Predicated region
        $region41: #{tpu_custom_call.1} parent=39 // pred_check
          %p256 = pneg %p39
        $region42: #{tpu_custom_call.1} parent=39 // pred_check_branch
          %258 = sbr.rel (%p256) target = $region44
        $region43: #{tpu_custom_call.1} parent=39 // pred_region
          %s259 = smul.u32 4, %s19
          %p260 = scmp.lt.s32.totalorder %s259, 7
          %s261 = scalar_select %p260, %s259, 7
          %s262 = smul.addr %s261, 3
          %s263 = smul.addr %s262, 4
          %s264 = scalar_lea.vmem %s0, %s263
          %s265 = smul.u32 4, %s19
        $region44: #{tpu_custom_call.1} parent=39 // pred_fallthru
          _
      $region40: #{tpu_custom_call.1} parent=5 // pred_fallthru
        _
      %p266 = scmp.le.s32.totalorder 1, %s19
      %p267 = scmp.lt.s32.totalorder %s19, 3
      %p268 = pnand %p266, %p267
      %p269 = pneg %p268
      // Predicated region
      $region45: #{tpu_custom_call.1} parent=5 // pred_check
        _
      $region46: #{tpu_custom_call.1} parent=5 // pred_check_branch
        %271 = sbr.rel (%p268) target = $region48
      $region47: #{tpu_custom_call.1} parent=5 // pred_region
        %s272 = ssub.s32 %s19, 1
        // Predicated region
        $region49: #{tpu_custom_call.1} parent=47 // pred_check
          %p273 = pneg %p66
        $region50: #{tpu_custom_call.1} parent=47 // pred_check_branch
          %275 = sbr.rel (%p273) target = $region52
        $region51: #{tpu_custom_call.1} parent=47 // pred_region
          %277 = dma.done [#allocation4], 5376
        $region52: #{tpu_custom_call.1} parent=47 // pred_fallthru
          _
        // Predicated region
        $region53: #{tpu_custom_call.1} parent=47 // pred_check
          %p278 = pneg %p108
        $region54: #{tpu_custom_call.1} parent=47 // pred_check_branch
          %280 = sbr.rel (%p278) target = $region56
        $region55: #{tpu_custom_call.1} parent=47 // pred_region
          %282 = dma.done [#allocation7], 4096
        $region56: #{tpu_custom_call.1} parent=47 // pred_fallthru
          _
        %s283 = smul.u32 4, %s24
        %p284 = scmp.lt.s32.totalorder %s283, 7
        %s285 = scalar_select %p284, %s283, 7
        %s286 = smul.addr %s285, 3
        %s287 = smul.addr %s286, 4
        %s288 = scalar_lea.vmem %s0, %s287
        %p289 = pneg %p45
        %p290 = pneg %p42
        %p291 = pneg %p66
        %p292 = pneg %p63
        %p293 = pneg %p87
        %p294 = pneg %p84
        %p295 = pneg %p108
        %p296 = pneg %p105
        %p297 = pneg %p129
        %p298 = pneg %p126
        %p299 = pneg %p150
        %p300 = pneg %p147
        %p301 = pneg %p171
        %p302 = pneg %p168
        %p303 = pneg %p197
        %p304 = pneg %p194
        %s305 = sand.u32 %s184, 1
        %s306 = scalar_lea.sflag [#allocation5], %s305
        %s307 = sand.u32 %s184, 1
        %s308 = smul.addr %s307, 4
        %s309 = scalar_lea.vmem [#allocation8], %s308
        %s310 = smul.u32 4, %s24
        %p311 = scmp.lt.s32.totalorder %s310, 7
        %s312 = scalar_select %p311, %s310, 7
        %s313 = smul.addr %s312, 3
        %s314 = smul.addr %s313, 4
        %s315 = scalar_lea.vmem %s0, %s314
        %s316 = smul.u32 4, %s24
        %v317 = vld [vmem:[%s315] sm:$0xf]
        %v318 = vld [vmem:[%s315 + $0x4] sm:$0xf]
        %v319 = vld [vmem:[%s315 + $0x8] sm:$0x1]
        %v320 = vld [vmem:[%s315 + $0xc] sm:$0xf]
        %v321 = vld [vmem:[%s315 + $0x10] sm:$0xf]
        %v322 = vld [vmem:[%s315 + $0x14] sm:$0x1]
        %v323 = vld [vmem:[%s315 + $0x18] sm:$0xf]
        %v324 = vld [vmem:[%s315 + $0x1c] sm:$0xf]
        %v325 = vld [vmem:[%s315 + $0x20] sm:$0x1]
        %v326 = vld [vmem:[%s315 + $0x24] sm:$0xf]
        %v327 = vld [vmem:[%s315 + $0x28] sm:$0xf]
        %v328 = vld [vmem:[%s315 + $0x2c] sm:$0x1]
        %v329 = vunpack.c.l.bf16 %v317
        %v330 = vunpack.c.l.bf16 %v318
        %v331 = vunpack.c.l.bf16 %v319
        %v332 = vunpack.c.l.bf16 %v320
        %v333 = vunpack.c.l.bf16 %v321
        %v334 = vunpack.c.l.bf16 %v322
        %v335 = vunpack.c.l.bf16 %v323
        %v336 = vunpack.c.l.bf16 %v324
        %v337 = vunpack.c.l.bf16 %v325
        %v338 = vunpack.c.l.bf16 %v326
        %v339 = vunpack.c.l.bf16 %v327
        %v340 = vunpack.c.l.bf16 %v328
        %v341 = vld [vmem:[#allocation3] sm:$0xff]
        %v342 = vld [vmem:[#allocation3 + $0x8] sm:$0xff]
        %v343 = vld [vmem:[#allocation3 + $0x10] sm:$0xff]
        %v344 = vld [vmem:[#allocation3 + $0x18] sm:$0xff]
        %v345 = vld [vmem:[#allocation3 + $0x20] sm:$0xff]
        %v346 = vld [vmem:[#allocation3 + $0x28] sm:$0xff]
        %v347 = vld [vmem:[#allocation3 + $0x30] sm:$0xff]
        %v348 = vld [vmem:[#allocation3 + $0x38] sm:$0xff]
        %v349 = vld [vmem:[#allocation3 + $0x40] sm:$0xff]
        %v350 = vld [vmem:[#allocation3 + $0x48] sm:$0xff]
        %v351 = vld [vmem:[#allocation3 + $0x50] sm:$0xff]
        %v352 = vld [vmem:[#allocation3 + $0x58] sm:$0xff]
        %v353 = vld [vmem:[#allocation3 + $0x60] sm:$0x3f]
        %v354 = vld [vmem:[#allocation3 + $0x68] sm:$0x3f]
        %vm367 = vcmask 1046528
        %v368 = vrot.slane %v329, 1
        %v369 = vrot.slane %v330, 1
        %v370 = vsel %vm367, %v368, %v369
        %v371 = vrot.slane %v331, 1
        %v372 = vsel %vm367, %v369, %v371
        %v373 = vrot.slane %v332, 1
        %v374 = vrot.slane %v333, 1
        %v375 = vsel %vm367, %v373, %v374
        %v376 = vrot.slane %v334, 1
        %v377 = vsel %vm367, %v374, %v376
        %v378 = vrot.slane %v335, 1
        %v379 = vrot.slane %v336, 1
        %v380 = vsel %vm367, %v378, %v379
        %v381 = vrot.slane %v337, 1
        %v382 = vsel %vm367, %v379, %v381
        %v383 = vrot.slane %v338, 1
        %v384 = vrot.slane %v339, 1
        %v385 = vsel %vm367, %v383, %v384
        %v386 = vrot.slane %v340, 1
        %v387 = vsel %vm367, %v384, %v386
        %s388 = scalar_lea.vmem [#allocation3], 112
        %v389 = vld [vmem:[%s388] sm:$0xff]
        %v390 = vld [vmem:[%s388 + $0x8] sm:$0xff]
        %v391 = vld [vmem:[%s388 + $0x10] sm:$0xff]
        %v392 = vld [vmem:[%s388 + $0x18] sm:$0xff]
        %v393 = vld [vmem:[%s388 + $0x20] sm:$0xff]
        %v394 = vld [vmem:[%s388 + $0x28] sm:$0xff]
        %v395 = vld [vmem:[%s388 + $0x30] sm:$0xff]
        %v396 = vld [vmem:[%s388 + $0x38] sm:$0xff]
        %v397 = vld [vmem:[%s388 + $0x40] sm:$0xff]
        %v398 = vld [vmem:[%s388 + $0x48] sm:$0xff]
        %v399 = vld [vmem:[%s388 + $0x50] sm:$0xff]
        %v400 = vld [vmem:[%s388 + $0x58] sm:$0xff]
        %v401 = vld [vmem:[%s388 + $0x60] sm:$0x3f]
        %v402 = vld [vmem:[%s388 + $0x68] sm:$0x3f]
        %vm403 = vcmask 441344
        %v404 = vsel %vm403, %v370, 0
        %v406 = vsel %vm403, %v372, 0
        %v408 = vsel %vm403, %v375, 0
        %v410 = vsel %vm403, %v377, 0
        %v412 = vsel %vm403, %v380, 0
        %v414 = vsel %vm403, %v382, 0
        %v416 = vsel %vm403, %v385, 0
        %v418 = vsel %vm403, %v387, 0
        %vm420 = vcmask 1045504
        %v422 = vsel %vm420, %v401, 0
        %v425 = vsel %vm420, %v402, 0
        %427 = vmatpush.msra.mxu0 0.0
        %428 = vmatpush.msra.mxu0 0.0
        %429 = vmatpush.msra.mxu0 0.0
        %430 = vmatpush.msra.mxu0 0.0
        %431 = vmatpush.msra.mxu0 0.0
        %432 = vmatpush.msra.mxu0 0.0
        %433 = vmatpush.msra.mxu0 0.0
        %434 = vmatpush.msra.mxu0 0.0
        %435 = vmatpush.msra.mxu0 0.0
        %436 = vmatpush.msra.mxu0 %v422
        %437 = vmatpush.msra.mxu0 %v399
        %438 = vmatpush.msra.mxu0 %v397
        %439 = vmatpush.msra.mxu0 %v395
        %440 = vmatpush.msra.mxu0 %v393
        %441 = vmatpush.msra.mxu0 %v391
        %442 = vmatpush.msra.mxu0 %v389
        %443 = vmatmul.f32.gmra.mxu0 %v404
        %v444 = vpop.f32.mrf.mxu0
        %v445 = vadd.f32 0.0, %v444
        %446 = vmatmul.f32.gmra.mxu0 %v406
        %v447 = vpop.f32.mrf.mxu0
        %v448 = vadd.f32 0.0, %v447
        %449 = vmatmul.f32.gmra.mxu0 %v408
        %v450 = vpop.f32.mrf.mxu0
        %v451 = vadd.f32 0.0, %v450
        %452 = vmatmul.f32.gmra.mxu0 %v410
        %v453 = vpop.f32.mrf.mxu0
        %v454 = vadd.f32 0.0, %v453
        %455 = vmatmul.f32.gmra.mxu0 %v412
        %v456 = vpop.f32.mrf.mxu0
        %v457 = vadd.f32 0.0, %v456
        %458 = vmatmul.f32.gmra.mxu0 %v414
        %v459 = vpop.f32.mrf.mxu0
        %v460 = vadd.f32 0.0, %v459
        %461 = vmatmul.f32.gmra.mxu0 %v416
        %v462 = vpop.f32.mrf.mxu0
        %v463 = vadd.f32 0.0, %v462
        %464 = vmatmul.f32.gmra.mxu0 %v418
        %v465 = vpop.f32.mrf.mxu0
        %v466 = vadd.f32 0.0, %v465
        %467 = vdwg.mxu0
        %468 = vmatpush.msra.mxu0 0.0
        %469 = vmatpush.msra.mxu0 0.0
        %470 = vmatpush.msra.mxu0 0.0
        %471 = vmatpush.msra.mxu0 0.0
        %472 = vmatpush.msra.mxu0 0.0
        %473 = vmatpush.msra.mxu0 0.0
        %474 = vmatpush.msra.mxu0 0.0
        %475 = vmatpush.msra.mxu0 0.0
        %476 = vmatpush.msra.mxu0 0.0
        %477 = vmatpush.msra.mxu0 %v425
        %478 = vmatpush.msra.mxu0 %v400
        %479 = vmatpush.msra.mxu0 %v398
        %480 = vmatpush.msra.mxu0 %v396
        %481 = vmatpush.msra.mxu0 %v394
        %482 = vmatpush.msra.mxu0 %v392
        %483 = vmatpush.msra.mxu0 %v390
        %484 = vmatmul.f32.gmra.mxu0 %v404
        %v485 = vpop.f32.mrf.mxu0
        %v486 = vadd.f32 0.0, %v485
        %487 = vmatmul.f32.gmra.mxu0 %v406
        %v488 = vpop.f32.mrf.mxu0
        %v489 = vadd.f32 0.0, %v488
        %490 = vmatmul.f32.gmra.mxu0 %v408
        %v491 = vpop.f32.mrf.mxu0
        %v492 = vadd.f32 0.0, %v491
        %493 = vmatmul.f32.gmra.mxu0 %v410
        %v494 = vpop.f32.mrf.mxu0
        %v495 = vadd.f32 0.0, %v494
        %496 = vmatmul.f32.gmra.mxu0 %v412
        %v497 = vpop.f32.mrf.mxu0
        %v498 = vadd.f32 0.0, %v497
        %499 = vmatmul.f32.gmra.mxu0 %v414
        %v500 = vpop.f32.mrf.mxu0
        %v501 = vadd.f32 0.0, %v500
        %502 = vmatmul.f32.gmra.mxu0 %v416
        %v503 = vpop.f32.mrf.mxu0
        %v504 = vadd.f32 0.0, %v503
        %505 = vmatmul.f32.gmra.mxu0 %v418
        %v506 = vpop.f32.mrf.mxu0
        %v507 = vadd.f32 0.0, %v506
        %508 = vdwg.mxu0
        %v509 = vsel %vm403, %v329, 0
        %v511 = vsel %vm403, %v330, 0
        %v513 = vsel %vm403, %v332, 0
        %v515 = vsel %vm403, %v333, 0
        %v517 = vsel %vm403, %v335, 0
        %v519 = vsel %vm403, %v336, 0
        %v521 = vsel %vm403, %v338, 0
        %v523 = vsel %vm403, %v339, 0
        %v526 = vsel %vm420, %v353, 0
        %v529 = vsel %vm420, %v354, 0
        %531 = vmatpush.msra.mxu0 0.0
        %532 = vmatpush.msra.mxu0 0.0
        %533 = vmatpush.msra.mxu0 0.0
        %534 = vmatpush.msra.mxu0 0.0
        %535 = vmatpush.msra.mxu0 0.0
        %536 = vmatpush.msra.mxu0 0.0
        %537 = vmatpush.msra.mxu0 0.0
        %538 = vmatpush.msra.mxu0 0.0
        %539 = vmatpush.msra.mxu0 0.0
        %540 = vmatpush.msra.mxu0 %v526
        %541 = vmatpush.msra.mxu0 %v351
        %542 = vmatpush.msra.mxu0 %v349
        %543 = vmatpush.msra.mxu0 %v347
        %544 = vmatpush.msra.mxu0 %v345
        %545 = vmatpush.msra.mxu0 %v343
        %546 = vmatpush.msra.mxu0 %v341
        %547 = vmatmul.f32.gmra.mxu0 %v509
        %v548 = vpop.f32.mrf.mxu0
        %v549 = vadd.f32 %v445, %v548
        %550 = vmatmul.f32.gmra.mxu0 %v511
        %v551 = vpop.f32.mrf.mxu0
        %v552 = vadd.f32 %v448, %v551
        %553 = vmatmul.f32.gmra.mxu0 %v513
        %v554 = vpop.f32.mrf.mxu0
        %v555 = vadd.f32 %v451, %v554
        %556 = vmatmul.f32.gmra.mxu0 %v515
        %v557 = vpop.f32.mrf.mxu0
        %v558 = vadd.f32 %v454, %v557
        %559 = vmatmul.f32.gmra.mxu0 %v517
        %v560 = vpop.f32.mrf.mxu0
        %v561 = vadd.f32 %v457, %v560
        %562 = vmatmul.f32.gmra.mxu0 %v519
        %v563 = vpop.f32.mrf.mxu0
        %v564 = vadd.f32 %v460, %v563
        %565 = vmatmul.f32.gmra.mxu0 %v521
        %v566 = vpop.f32.mrf.mxu0
        %v567 = vadd.f32 %v463, %v566
        %568 = vmatmul.f32.gmra.mxu0 %v523
        %v569 = vpop.f32.mrf.mxu0
        %v570 = vadd.f32 %v466, %v569
        %571 = vdwg.mxu0
        %572 = vmatpush.msra.mxu0 0.0
        %573 = vmatpush.msra.mxu0 0.0
        %574 = vmatpush.msra.mxu0 0.0
        %575 = vmatpush.msra.mxu0 0.0
        %576 = vmatpush.msra.mxu0 0.0
        %577 = vmatpush.msra.mxu0 0.0
        %578 = vmatpush.msra.mxu0 0.0
        %579 = vmatpush.msra.mxu0 0.0
        %580 = vmatpush.msra.mxu0 0.0
        %581 = vmatpush.msra.mxu0 %v529
        %582 = vmatpush.msra.mxu0 %v352
        %583 = vmatpush.msra.mxu0 %v350
        %584 = vmatpush.msra.mxu0 %v348
        %585 = vmatpush.msra.mxu0 %v346
        %586 = vmatpush.msra.mxu0 %v344
        %587 = vmatpush.msra.mxu0 %v342
        %588 = vmatmul.f32.gmra.mxu0 %v509
        %v589 = vpop.f32.mrf.mxu0
        %v590 = vadd.f32 %v486, %v589
        %591 = vmatmul.f32.gmra.mxu0 %v511
        %v592 = vpop.f32.mrf.mxu0
        %v593 = vadd.f32 %v489, %v592
        %594 = vmatmul.f32.gmra.mxu0 %v513
        %v595 = vpop.f32.mrf.mxu0
        %v596 = vadd.f32 %v492, %v595
        %597 = vmatmul.f32.gmra.mxu0 %v515
        %v598 = vpop.f32.mrf.mxu0
        %v599 = vadd.f32 %v495, %v598
        %600 = vmatmul.f32.gmra.mxu0 %v517
        %v601 = vpop.f32.mrf.mxu0
        %v602 = vadd.f32 %v498, %v601
        %603 = vmatmul.f32.gmra.mxu0 %v519
        %v604 = vpop.f32.mrf.mxu0
        %v605 = vadd.f32 %v501, %v604
        %606 = vmatmul.f32.gmra.mxu0 %v521
        %v607 = vpop.f32.mrf.mxu0
        %v608 = vadd.f32 %v504, %v607
        %609 = vmatmul.f32.gmra.mxu0 %v523
        %v610 = vpop.f32.mrf.mxu0
        %v611 = vadd.f32 %v507, %v610
        %612 = vdwg.mxu0
        %v613 = vrot.slane %v329, 2
        %v614 = vrot.slane %v330, 2
        %v615 = vsel %vm420, %v613, %v614
        %v616 = vrot.slane %v331, 2
        %v617 = vsel %vm420, %v614, %v616
        %v618 = vrot.slane %v332, 2
        %v619 = vrot.slane %v333, 2
        %v620 = vsel %vm420, %v618, %v619
        %v621 = vrot.slane %v334, 2
        %v622 = vsel %vm420, %v619, %v621
        %v623 = vrot.slane %v335, 2
        %v624 = vrot.slane %v336, 2
        %v625 = vsel %vm420, %v623, %v624
        %v626 = vrot.slane %v337, 2
        %v627 = vsel %vm420, %v624, %v626
        %v628 = vrot.slane %v338, 2
        %v629 = vrot.slane %v339, 2
        %v630 = vsel %vm420, %v628, %v629
        %v631 = vrot.slane %v340, 2
        %v632 = vsel %vm420, %v629, %v631
        %s633 = scalar_lea.vmem [#allocation3], 224
        %v634 = vld [vmem:[%s633] sm:$0xff]
        %v635 = vld [vmem:[%s633 + $0x8] sm:$0xff]
        %v636 = vld [vmem:[%s633 + $0x10] sm:$0xff]
        %v637 = vld [vmem:[%s633 + $0x18] sm:$0xff]
        %v638 = vld [vmem:[%s633 + $0x20] sm:$0xff]
        %v639 = vld [vmem:[%s633 + $0x28] sm:$0xff]
        %v640 = vld [vmem:[%s633 + $0x30] sm:$0xff]
        %v641 = vld [vmem:[%s633 + $0x38] sm:$0xff]
        %v642 = vld [vmem:[%s633 + $0x40] sm:$0xff]
        %v643 = vld [vmem:[%s633 + $0x48] sm:$0xff]
        %v644 = vld [vmem:[%s633 + $0x50] sm:$0xff]
        %v645 = vld [vmem:[%s633 + $0x58] sm:$0xff]
        %v646 = vld [vmem:[%s633 + $0x60] sm:$0x3f]
        %v647 = vld [vmem:[%s633 + $0x68] sm:$0x3f]
        %v648 = vsel %vm403, %v615, 0
        %v650 = vsel %vm403, %v617, 0
        %v652 = vsel %vm403, %v620, 0
        %v654 = vsel %vm403, %v622, 0
        %v656 = vsel %vm403, %v625, 0
        %v658 = vsel %vm403, %v627, 0
        %v660 = vsel %vm403, %v630, 0
        %v662 = vsel %vm403, %v632, 0
        %v665 = vsel %vm420, %v646, 0
        %v668 = vsel %vm420, %v647, 0
        %670 = vmatpush.msra.mxu0 0.0
        %671 = vmatpush.msra.mxu0 0.0
        %672 = vmatpush.msra.mxu0 0.0
        %673 = vmatpush.msra.mxu0 0.0
        %674 = vmatpush.msra.mxu0 0.0
        %675 = vmatpush.msra.mxu0 0.0
        %676 = vmatpush.msra.mxu0 0.0
        %677 = vmatpush.msra.mxu0 0.0
        %678 = vmatpush.msra.mxu0 0.0
        %679 = vmatpush.msra.mxu0 %v665
        %680 = vmatpush.msra.mxu0 %v644
        %681 = vmatpush.msra.mxu0 %v642
        %682 = vmatpush.msra.mxu0 %v640
        %683 = vmatpush.msra.mxu0 %v638
        %684 = vmatpush.msra.mxu0 %v636
        %685 = vmatpush.msra.mxu0 %v634
        %686 = vmatmul.f32.gmra.mxu0 %v648
        %v687 = vpop.f32.mrf.mxu0
        %v688 = vadd.f32 0.0, %v687
        %689 = vmatmul.f32.gmra.mxu0 %v650
        %v690 = vpop.f32.mrf.mxu0
        %v691 = vadd.f32 0.0, %v690
        %692 = vmatmul.f32.gmra.mxu0 %v652
        %v693 = vpop.f32.mrf.mxu0
        %v694 = vadd.f32 0.0, %v693
        %695 = vmatmul.f32.gmra.mxu0 %v654
        %v696 = vpop.f32.mrf.mxu0
        %v697 = vadd.f32 0.0, %v696
        %698 = vmatmul.f32.gmra.mxu0 %v656
        %v699 = vpop.f32.mrf.mxu0
        %v700 = vadd.f32 0.0, %v699
        %701 = vmatmul.f32.gmra.mxu0 %v658
        %v702 = vpop.f32.mrf.mxu0
        %v703 = vadd.f32 0.0, %v702
        %704 = vmatmul.f32.gmra.mxu0 %v660
        %v705 = vpop.f32.mrf.mxu0
        %v706 = vadd.f32 0.0, %v705
        %707 = vmatmul.f32.gmra.mxu0 %v662
        %v708 = vpop.f32.mrf.mxu0
        %v709 = vadd.f32 0.0, %v708
        %710 = vdwg.mxu0
        %711 = vmatpush.msra.mxu0 0.0
        %712 = vmatpush.msra.mxu0 0.0
        %713 = vmatpush.msra.mxu0 0.0
        %714 = vmatpush.msra.mxu0 0.0
        %715 = vmatpush.msra.mxu0 0.0
        %716 = vmatpush.msra.mxu0 0.0
        %717 = vmatpush.msra.mxu0 0.0
        %718 = vmatpush.msra.mxu0 0.0
        %719 = vmatpush.msra.mxu0 0.0
        %720 = vmatpush.msra.mxu0 %v668
        %721 = vmatpush.msra.mxu0 %v645
        %722 = vmatpush.msra.mxu0 %v643
        %723 = vmatpush.msra.mxu0 %v641
        %724 = vmatpush.msra.mxu0 %v639
        %725 = vmatpush.msra.mxu0 %v637
        %726 = vmatpush.msra.mxu0 %v635
        %727 = vmatmul.f32.gmra.mxu0 %v648
        %v728 = vpop.f32.mrf.mxu0
        %v729 = vadd.f32 0.0, %v728
        %730 = vmatmul.f32.gmra.mxu0 %v650
        %v731 = vpop.f32.mrf.mxu0
        %v732 = vadd.f32 0.0, %v731
        %733 = vmatmul.f32.gmra.mxu0 %v652
        %v734 = vpop.f32.mrf.mxu0
        %v735 = vadd.f32 0.0, %v734
        %736 = vmatmul.f32.gmra.mxu0 %v654
        %v737 = vpop.f32.mrf.mxu0
        %v738 = vadd.f32 0.0, %v737
        %739 = vmatmul.f32.gmra.mxu0 %v656
        %v740 = vpop.f32.mrf.mxu0
        %v741 = vadd.f32 0.0, %v740
        %742 = vmatmul.f32.gmra.mxu0 %v658
        %v743 = vpop.f32.mrf.mxu0
        %v744 = vadd.f32 0.0, %v743
        %745 = vmatmul.f32.gmra.mxu0 %v660
        %v746 = vpop.f32.mrf.mxu0
        %v747 = vadd.f32 0.0, %v746
        %748 = vmatmul.f32.gmra.mxu0 %v662
        %v749 = vpop.f32.mrf.mxu0
        %v750 = vadd.f32 0.0, %v749
        %751 = vdwg.mxu0
        %v752 = vadd.f32 %v549, %v688
        %v753 = vadd.f32 %v590, %v729
        %v754 = vadd.f32 %v552, %v691
        %v755 = vadd.f32 %v593, %v732
        %v756 = vadd.f32 %v555, %v694
        %v757 = vadd.f32 %v596, %v735
        %v758 = vadd.f32 %v558, %v697
        %v759 = vadd.f32 %v599, %v738
        %v760 = vadd.f32 %v561, %v700
        %v761 = vadd.f32 %v602, %v741
        %v762 = vadd.f32 %v564, %v703
        %v763 = vadd.f32 %v605, %v744
        %v764 = vadd.f32 %v567, %v706
        %v765 = vadd.f32 %v608, %v747
        %v766 = vadd.f32 %v570, %v709
        %v767 = vadd.f32 %v611, %v750
        %v768 = vld [vmem:[%s2] sm:$0x3]
        %v770 = vperm.slane %v768, 0
        %v771 = vperm.slane %v768, 1
        %v774 = vadd.f32 %v752, %v770
        %v775 = vadd.f32 %v753, %v771
        %v776 = vadd.f32 %v754, %v770
        %v777 = vadd.f32 %v755, %v771
        %v778 = vadd.f32 %v756, %v770
        %v779 = vadd.f32 %v757, %v771
        %v780 = vadd.f32 %v758, %v770
        %v781 = vadd.f32 %v759, %v771
        %v782 = vadd.f32 %v760, %v770
        %v783 = vadd.f32 %v761, %v771
        %v784 = vadd.f32 %v762, %v770
        %v785 = vadd.f32 %v763, %v771
        %v786 = vadd.f32 %v764, %v770
        %v787 = vadd.f32 %v765, %v771
        %v788 = vadd.f32 %v766, %v770
        %v789 = vadd.f32 %v767, %v771
        %v790 = vmax.f32 %v774, 0.0
        %v791 = vmax.f32 %v775, 0.0
        %v792 = vmax.f32 %v776, 0.0
        %v793 = vmax.f32 %v777, 0.0
        %v794 = vmax.f32 %v778, 0.0
        %v795 = vmax.f32 %v779, 0.0
        %v796 = vmax.f32 %v780, 0.0
        %v797 = vmax.f32 %v781, 0.0
        %v798 = vmax.f32 %v782, 0.0
        %v799 = vmax.f32 %v783, 0.0
        %v800 = vmax.f32 %v784, 0.0
        %v801 = vmax.f32 %v785, 0.0
        %v802 = vmax.f32 %v786, 0.0
        %v803 = vmax.f32 %v787, 0.0
        %v804 = vmax.f32 %v788, 0.0
        %v805 = vmax.f32 %v789, 0.0
        %v806 = vadd.f32 %v790, %v792
        %v807 = vrot.slane %v806, 4
        %v808 = vadd.f32 %v806, %v807
        %v809 = vrot.slane %v808, 2
        %v810 = vadd.f32 %v808, %v809
        %v811 = vrot.slane %v810, 1
        %v812 = vadd.f32 %v810, %v811
        %v813 = vadd.f32 %v791, %v793
        %v814 = vrot.slane %v813, 4
        %v815 = vadd.f32 %v813, %v814
        %v816 = vrot.slane %v815, 2
        %v817 = vadd.f32 %v815, %v816
        %v818 = vrot.slane %v817, 1
        %v819 = vadd.f32 %v817, %v818
        %v820 = vadd.f32 %v794, %v796
        %v821 = vrot.slane %v820, 4
        %v822 = vadd.f32 %v820, %v821
        %v823 = vrot.slane %v822, 2
        %v824 = vadd.f32 %v822, %v823
        %v825 = vrot.slane %v824, 1
        %v826 = vadd.f32 %v824, %v825
        %v827 = vadd.f32 %v795, %v797
        %v828 = vrot.slane %v827, 4
        %v829 = vadd.f32 %v827, %v828
        %v830 = vrot.slane %v829, 2
        %v831 = vadd.f32 %v829, %v830
        %v832 = vrot.slane %v831, 1
        %v833 = vadd.f32 %v831, %v832
        %v834 = vadd.f32 %v798, %v800
        %v835 = vrot.slane %v834, 4
        %v836 = vadd.f32 %v834, %v835
        %v837 = vrot.slane %v836, 2
        %v838 = vadd.f32 %v836, %v837
        %v839 = vrot.slane %v838, 1
        %v840 = vadd.f32 %v838, %v839
        %v841 = vadd.f32 %v799, %v801
        %v842 = vrot.slane %v841, 4
        %v843 = vadd.f32 %v841, %v842
        %v844 = vrot.slane %v843, 2
        %v845 = vadd.f32 %v843, %v844
        %v846 = vrot.slane %v845, 1
        %v847 = vadd.f32 %v845, %v846
        %v848 = vadd.f32 %v802, %v804
        %v849 = vrot.slane %v848, 4
        %v850 = vadd.f32 %v848, %v849
        %v851 = vrot.slane %v850, 2
        %v852 = vadd.f32 %v850, %v851
        %v853 = vrot.slane %v852, 1
        %v854 = vadd.f32 %v852, %v853
        %v855 = vadd.f32 %v803, %v805
        %v856 = vrot.slane %v855, 4
        %v857 = vadd.f32 %v855, %v856
        %v858 = vrot.slane %v857, 2
        %v859 = vadd.f32 %v857, %v858
        %v860 = vrot.slane %v859, 1
        %v861 = vadd.f32 %v859, %v860
        %v862 = vld [vmem:[#allocation6] sm:$0xff]
        %v863 = vld [vmem:[#allocation6 + $0x8] sm:$0xff]
        %v864 = vld [vmem:[#allocation6 + $0x10] sm:$0xff]
        %v865 = vld [vmem:[#allocation6 + $0x18] sm:$0xff]
        %v866 = vld [vmem:[#allocation6 + $0x20] sm:$0xff]
        %v867 = vld [vmem:[#allocation6 + $0x28] sm:$0xff]
        %v868 = vld [vmem:[#allocation6 + $0x30] sm:$0xff]
        %v869 = vld [vmem:[#allocation6 + $0x38] sm:$0xff]
        %v870 = vld [vmem:[#allocation6 + $0x40] sm:$0xff]
        %v871 = vld [vmem:[#allocation6 + $0x48] sm:$0xff]
        %v872 = vld [vmem:[#allocation6 + $0x50] sm:$0xff]
        %v873 = vld [vmem:[#allocation6 + $0x58] sm:$0xff]
        %v874 = vld [vmem:[#allocation6 + $0x60] sm:$0xff]
        %v875 = vld [vmem:[#allocation6 + $0x68] sm:$0xff]
        %v876 = vld [vmem:[#allocation6 + $0x70] sm:$0xff]
        %v877 = vld [vmem:[#allocation6 + $0x78] sm:$0xff]
        %v878 = vld [vmem:[#allocation6 + $0x80] sm:$0xff]
        %v879 = vld [vmem:[#allocation6 + $0x88] sm:$0xff]
        %v880 = vld [vmem:[#allocation6 + $0x90] sm:$0xff]
        %v881 = vld [vmem:[#allocation6 + $0x98] sm:$0xff]
        %v882 = vld [vmem:[#allocation6 + $0xa0] sm:$0xff]
        %v883 = vld [vmem:[#allocation6 + $0xa8] sm:$0xff]
        %v884 = vld [vmem:[#allocation6 + $0xb0] sm:$0xff]
        %v885 = vld [vmem:[#allocation6 + $0xb8] sm:$0xff]
        %v886 = vld [vmem:[#allocation6 + $0xc0] sm:$0xff]
        %v887 = vld [vmem:[#allocation6 + $0xc8] sm:$0xff]
        %v888 = vld [vmem:[#allocation6 + $0xd0] sm:$0xff]
        %v889 = vld [vmem:[#allocation6 + $0xd8] sm:$0xff]
        %v890 = vld [vmem:[#allocation6 + $0xe0] sm:$0xff]
        %v891 = vld [vmem:[#allocation6 + $0xe8] sm:$0xff]
        %v892 = vld [vmem:[#allocation6 + $0xf0] sm:$0xff]
        %v893 = vld [vmem:[#allocation6 + $0xf8] sm:$0xff]
        %v894 = vld [vmem:[%s4] sm:$0x1]
        %v896 = vperm.slane %v894, 0
        %vm906 = vcmask 1041409
        %v907 = vsel %vm906, %v826, %v812
        %vm908 = vcmask 1042434
        %v909 = vsel %vm908, %v840, %v907
        %vm910 = vcmask 1043459
        %v911 = vsel %vm910, %v854, %v909
        %v912 = vsel %vm906, %v833, %v819
        %v913 = vsel %vm908, %v847, %v912
        %v914 = vsel %vm910, %v861, %v913
        %917 = vmatpush.msra.mxu0 %v877
        %918 = vmatpush.msra.mxu0 %v876
        %919 = vmatpush.msra.mxu0 %v875
        %920 = vmatpush.msra.mxu0 %v874
        %921 = vmatpush.msra.mxu0 %v873
        %922 = vmatpush.msra.mxu0 %v872
        %923 = vmatpush.msra.mxu0 %v871
        %924 = vmatpush.msra.mxu0 %v870
        %925 = vmatpush.msra.mxu0 %v869
        %926 = vmatpush.msra.mxu0 %v868
        %927 = vmatpush.msra.mxu0 %v867
        %928 = vmatpush.msra.mxu0 %v866
        %929 = vmatpush.msra.mxu0 %v865
        %930 = vmatpush.msra.mxu0 %v864
        %931 = vmatpush.msra.mxu0 %v863
        %932 = vmatpush.msra.mxu0 %v862
        %933 = vmatmul.f32.gmra.mxu0 %v911
        %v934 = vpop.f32.mrf.mxu0
        %v935 = vadd.f32 %v896, %v934
        %936 = vdwg.mxu0
        %937 = vmatpush.msra.mxu0 %v893
        %938 = vmatpush.msra.mxu0 %v892
        %939 = vmatpush.msra.mxu0 %v891
        %940 = vmatpush.msra.mxu0 %v890
        %941 = vmatpush.msra.mxu0 %v889
        %942 = vmatpush.msra.mxu0 %v888
        %943 = vmatpush.msra.mxu0 %v887
        %944 = vmatpush.msra.mxu0 %v886
        %945 = vmatpush.msra.mxu0 %v885
        %946 = vmatpush.msra.mxu0 %v884
        %947 = vmatpush.msra.mxu0 %v883
        %948 = vmatpush.msra.mxu0 %v882
        %949 = vmatpush.msra.mxu0 %v881
        %950 = vmatpush.msra.mxu0 %v880
        %951 = vmatpush.msra.mxu0 %v879
        %952 = vmatpush.msra.mxu0 %v878
        %953 = vmatmul.f32.gmra.mxu0 %v914
        %v954 = vpop.f32.mrf.mxu0
        %v955 = vadd.f32 %v935, %v954
        %956 = vdwg.mxu0
        %v957 = vmax.f32 %v955, 0.0
        %v958 = vld [vmem:[%s5] sm:$0x1]
        %v960 = vperm.slane %v958, 0
        %v962 = vmul.f32 %v957, %v960
        %vm963 = vcmask 1043456
        %v964 = vsel %vm963, %v962, 0.0
        %965 = vadd.xlane.f32.xlu0 %v964
        %v966 = vpop.xlane.xlu0 %965
        %s967 = sld [smem:[#allocation2]]
        %v968 = vstv %s967
        %v969 = vadd.f32 %v966, %v968
        %v970 = vlaneseq
        %v971 = vand.u32 %v970, 127
        %vm972 = vcmp.eq.s32.totalorder %v971, 32
        %v973 = vsel %vm972, %v969, %v957
        %974 = vst [vmem:[%s309] sm:$0xf] %v973
        %s975 = sand.u32 %s184, 1
        %s976 = scalar_lea.sflag [#allocation5], %s975
        %s977 = sand.u32 %s184, 1
        %s978 = smul.addr %s977, 4
        %s979 = scalar_lea.vmem [#allocation8], %s978
        // Predicated region
        $region57: #{tpu_custom_call.1} parent=47 // pred_check
          %p980 = pneg %p194
        $region58: #{tpu_custom_call.1} parent=47 // pred_check_branch
          %982 = sbr.rel (%p980) target = $region60
        $region59: #{tpu_custom_call.1} parent=47 // pred_region
          %984 = vsyncadd %s976, 0
          %s985 = smul.addr %s24, 4
          %s986 = scalar_lea.hbm %s7, %s985
          %s988 = sshll.u32 %s979, 4
          %s989 = int_to_ptr.vmem [resolvable:$true] %s988
          %s990 = sshll.u32 %s986, 4
          %s991 = int_to_ptr.hbm [resolvable:$true] %s990
          %993 = dma.vmem_to_hbm [thread:$0]  %s989, 64, %s991, %s976
        $region60: #{tpu_custom_call.1} parent=47 // pred_fallthru
          _
      $region48: #{tpu_custom_call.1} parent=5 // pred_fallthru
        _
      %p994 = scmp.le.s32.totalorder 2, %s19
      // Predicated region
      $region61: #{tpu_custom_call.1} parent=5 // pred_check
        %p995 = pneg %p994
      $region62: #{tpu_custom_call.1} parent=5 // pred_check_branch
        %997 = sbr.rel (%p995) target = $region64
      $region63: #{tpu_custom_call.1} parent=5 // pred_region
        %s998 = ssub.s32 %s19, 2
        // Predicated region
        $region65: #{tpu_custom_call.1} parent=63 // pred_check
          %p999 = pneg %p200
        $region66: #{tpu_custom_call.1} parent=63 // pred_check_branch
          %1001 = sbr.rel (%p999) target = $region68
        $region67: #{tpu_custom_call.1} parent=63 // pred_region
          %s1002 = sand.u32 %s185, 1
          %s1003 = scalar_lea.sflag [#allocation5], %s1002
          %s1004 = sand.u32 %s185, 1
          %s1005 = smul.addr %s1004, 4
          %s1006 = scalar_lea.vmem [#allocation8], %s1005
          %1008 = dma.done %s1003, 64
        $region68: #{tpu_custom_call.1} parent=63 // pred_fallthru
          _
      $region64: #{tpu_custom_call.1} parent=5 // pred_fallthru
        _
    $region6: #{tpu_custom_call.1} parent=1 // loop_footer
      %s23 = sadd.s32 1, %s19
    $region7: #{tpu_custom_call.1} parent=1 // loop_footer_branch
      %18 = sbr.rel target = $region3
    $region8: #{tpu_custom_call.1} parent=1 // loop_exit
      _
    %1009 = vsyncpa [#allocation4], 1
    %s1010 = scalar_lea.sflag [#allocation4], 1
    %1011 = vsyncpa %s1010, 1
    %1012 = vsyncpa [#allocation7], 1
    %1013 = vsyncpa [#allocation5], 1
    %s1014 = scalar_lea.sflag [#allocation5], 1
    %1015 = vsyncpa %s1014, 1

</llo_original>
